<compile_context>
chip_gen: v5e
topology: v5e:2x2
jax: 0.10.0
libtpu: 0.0.40
codegen_flags: <defaults>
</compile_context>

<pallas_src>
import jax
import jax.numpy as jnp
from jax.experimental import pallas as pl
from jax.experimental.pallas import tpu as pltpu

_MIB = 1024 * 1024


# ----------------------------------------------------------------------------
# Kernels
# ----------------------------------------------------------------------------
def _ffn_kernel_out_acc(x_ref, w1_ref, b1_ref, w2_ref, b2_ref, o_ref):
    """f32 output: accumulate directly into the resident output block."""
    k = pl.program_id(1)

    @pl.when(k == 0)
    def _():
        o_ref[...] = jnp.zeros_like(o_ref)

    # First matmul + bias + ReLU (bf16 operands, f32 accumulation on the MXU).
    h = jnp.dot(x_ref[...], w1_ref[...], preferred_element_type=jnp.float32)
    h = jnp.maximum(h + b1_ref[...], 0.0)

    # Second matmul: accumulate this d_ff slice's contribution.
    o_ref[...] += jnp.dot(
        h.astype(w2_ref.dtype), w2_ref[...], preferred_element_type=jnp.float32
    )

    @pl.when(k == pl.num_programs(1) - 1)
    def _():
        o_ref[...] += b2_ref[...]


def _ffn_kernel_scratch_acc(x_ref, w1_ref, b1_ref, w2_ref, b2_ref, o_ref, acc_ref):
    """Non-f32 output: f32 scratch accumulator, cast on the last k step."""
    k = pl.program_id(1)

    @pl.when(k == 0)
    def _():
        acc_ref[...] = jnp.zeros_like(acc_ref)

    h = jnp.dot(x_ref[...], w1_ref[...], preferred_element_type=jnp.float32)
    h = jnp.maximum(h + b1_ref[...], 0.0)
    acc_ref[...] += jnp.dot(
        h.astype(w2_ref.dtype), w2_ref[...], preferred_element_type=jnp.float32
    )

    @pl.when(k == pl.num_programs(1) - 1)
    def _():
        o_ref[...] = (acc_ref[...] + b2_ref[...]).astype(o_ref.dtype)


# ----------------------------------------------------------------------------
# Tile / VMEM budgeting helpers
# ----------------------------------------------------------------------------
def _vmem_capacity_bytes():
    try:
        return int(pltpu.get_tpu_info().vmem_capacity_bytes)
    except Exception:
        return 64 * _MIB  # conservative: v7x per-TensorCore capacity


def _choose_ff_tile(d_ff, tf_target):
    """Lane-aligned d_ff tile; never pull the full (large) d_ff slab per step.

    Returns (tf, d_ff_padded).  Prefers the largest divisor of d_ff that is a
    multiple of 128 and <= tf_target; otherwise pads d_ff to a multiple of
    tf_target (padding with zeros is exact: zero W1 cols / b1 / W2 rows
    contribute nothing to the output).
    """
    if d_ff <= tf_target:
        return d_ff, d_ff
    for cand in range(tf_target, 127, -128):
        if d_ff % cand == 0:
            return cand, d_ff
    d_ff_p = -(-d_ff // tf_target) * tf_target
    return tf_target, d_ff_p


# ----------------------------------------------------------------------------
# Wrapper
# ----------------------------------------------------------------------------
def feed_forward_pallas(
    x,
    w1,  # (d_model, d_ff)   == linear_1.weight.T
    b1,  # (d_ff,)
    w2,  # (d_ff, d_model)   == linear_2.weight.T
    b2,  # (d_model,)
    *,
    compute_dtype=jnp.bfloat16,   # MXU operand dtype (f32 accumulation)
    row_tile=None,
    ff_tile=None,
    vmem_limit_bytes=None,
):
    orig_shape = x.shape
    out_dtype = x.dtype
    d_model = orig_shape[-1]
    d_ff = w1.shape[1]
    assert w1.shape == (d_model, d_ff)
    assert b1.shape == (d_ff,)
    assert w2.shape == (d_ff, d_model)
    assert b2.shape == (d_model,)

    # --- generation-aware VMEM budget ------------------------------------
    vmem_cap = _vmem_capacity_bytes()
    if vmem_limit_bytes is None:
        # ~90 MiB on 128 MiB parts (v5e/v6e), ~44 MiB on 64 MiB parts (v7x).
        vmem_limit_bytes = max(32 * _MIB, min(int(vmem_cap * 0.70), vmem_cap - 20 * _MIB))
    big_vmem = vmem_limit_bytes >= 80 * _MIB     # v5e / v6e class
    two_core = vmem_cap <= 96 * _MIB             # heuristic: v7x (2 TCs / chip)

    in_bytes = jnp.dtype(compute_dtype).itemsize
    out_bytes = jnp.dtype(out_dtype).itemsize
    use_out_acc = out_dtype == jnp.float32

    rt_target = row_tile if row_tile is not None else (1024 if big_vmem else 512)
    rt_target = max(8, (int(rt_target) // 8) * 8)
    tf_target = ff_tile if ff_tile is not None else (1024 if big_vmem else 512)
    tf_target = max(128, (int(tf_target) // 128) * 128)

    def vmem_estimate(rt, tf):
        inputs = 2 * (rt * d_model + 2 * d_model * tf) * in_bytes  # x, W1, W2 (dbl-buf)
        biases = 2 * (tf + d_model) * 4
        outputs = 2 * rt * d_model * out_bytes
        acc = 0 if use_out_acc else rt * d_model * 4
        h_tmp = rt * tf * (4 + in_bytes)                           # f32 h + bf16 copy
        return inputs + biases + outputs + acc + h_tmp

    budget = int(vmem_limit_bytes * 0.8)  # headroom for compiler-internal scratch

    tf, d_ff_p = _choose_ff_tile(d_ff, tf_target)
    while tf > 128 and vmem_estimate(8, tf) > budget:
        tf, d_ff_p = _choose_ff_tile(d_ff, max(128, ((tf // 2) // 128) * 128))

    rt = rt_target
    while rt > 8 and vmem_estimate(rt, tf) > budget:
        rt = max(8, rt // 2)

    # --- row tiling --------------------------------------------------------
    x2d = x.reshape(-1, d_model)
    rows = x2d.shape[0]
    if rows >= 8:
        rt = max(8, (min(rt, rows) // 8) * 8)
        # v7x: make sure both TensorCores get at least one row tile.
        if two_core and rows >= 16 and -(-rows // rt) < 2:
            rt = max(8, ((-(-rows // 2)) + 7) // 8 * 8)
    else:
        rt = rows
    rows_p = -(-rows // rt) * rt

    # --- padding ------------------------------------------------------------
    if rows_p != rows:
        x2d = jnp.pad(x2d, ((0, rows_p - rows), (0, 0)))
    if d_ff_p != d_ff:
        w1 = jnp.pad(w1, ((0, 0), (0, d_ff_p - d_ff)))
        b1 = jnp.pad(b1, ((0, d_ff_p - d_ff),))
        w2 = jnp.pad(w2, ((0, d_ff_p - d_ff), (0, 0)))

    # --- dtype handling: MXU operands in bf16, biases / accumulation in f32 --
    x_c = x2d.astype(compute_dtype)
    w1_c = w1.astype(compute_dtype)
    w2_c = w2.astype(compute_dtype)
    b1_2d = b1.reshape(1, d_ff_p).astype(jnp.float32)
    b2_2d = b2.reshape(1, d_model).astype(jnp.float32)

    grid = (rows_p // rt, d_ff_p // tf)

    kernel = _ffn_kernel_out_acc if use_out_acc else _ffn_kernel_scratch_acc
    scratch = [] if use_out_acc else [pltpu.VMEM((rt, d_model), jnp.float32)]

    flops = 4 * rows_p * d_model * d_ff_p
    bytes_accessed = int(
        x_c.size * in_bytes
        + w1_c.size * in_bytes
        + w2_c.size * in_bytes
        + (d_ff_p + d_model) * 4
        + rows_p * d_model * out_bytes
    )
    cost = pl.CostEstimate(
        flops=int(flops), transcendentals=0, bytes_accessed=bytes_accessed
    )

    out2d = pl.pallas_call(
        kernel,
        out_shape=jax.ShapeDtypeStruct((rows_p, d_model), out_dtype),
        grid_spec=pltpu.PrefetchScalarGridSpec(
            num_scalar_prefetch=0,
            grid=grid,
            in_specs=[
                pl.BlockSpec((rt, d_model), lambda i, k: (i, 0)),   # x rows
                pl.BlockSpec((d_model, tf), lambda i, k: (0, k)),   # W1 slice
                pl.BlockSpec((1, tf), lambda i, k: (0, k)),         # b1 slice
                pl.BlockSpec((tf, d_model), lambda i, k: (k, 0)),   # W2 slice
                pl.BlockSpec((1, d_model), lambda i, k: (0, 0)),    # b2
            ],
            out_specs=pl.BlockSpec((rt, d_model), lambda i, k: (i, 0)),
            scratch_shapes=scratch,
        ),
        compiler_params=pltpu.CompilerParams(
            dimension_semantics=("parallel", "arbitrary"),
            vmem_limit_bytes=int(vmem_limit_bytes),
        ),
        cost_estimate=cost,
    )(x_c, w1_c, b1_2d, w2_c, b2_2d)

    if rows_p != rows:
        out2d = out2d[:rows]
    return out2d.reshape(orig_shape)


if __name__ == "__main__":
    batch, seq, d_model, d_ff = 2, 8, 32, 64

    key = jax.random.PRNGKey(0)
    kx, kw1, kb1, kw2, kb2 = jax.random.split(key, 5)

    x = jax.random.normal(kx, (batch, seq, d_model), dtype=jnp.float32)
    # Weights in math layout (transpose of PyTorch nn.Linear.weight).
    w1 = jax.random.normal(kw1, (d_model, d_ff), dtype=jnp.float32) * 0.1
    b1 = jax.random.normal(kb1, (d_ff,), dtype=jnp.float32) * 0.1
    w2 = jax.random.normal(kw2, (d_ff, d_model), dtype=jnp.float32) * 0.1
    b2 = jax.random.normal(kb2, (d_model,), dtype=jnp.float32) * 0.1

    out = feed_forward_pallas(x, w1, b1, w2, b2)
    out = jax.block_until_ready(out)

    # Pure-JAX f32 reference (eval-mode forward: dropout is identity).
    x2d = x.reshape(-1, d_model)
    h = jnp.maximum(x2d @ w1 + b1, 0.0)
    ref = (h @ w2 + b2).reshape(batch, seq, d_model)

    assert out.shape == ref.shape
    # Kernel feeds the MXU bf16 operands with f32 accumulation -> compare at
    # bf16-level tolerance against the f32 reference.
    assert jnp.allclose(out, ref, atol=2e-2, rtol=2e-2), "mismatch vs reference"

    print("KERNEL_OK")
</pallas_src>

<mosaic_0001>
module attributes {stable_mosaic.version = 11 : i64} {
  func.func @_ffn_kernel_out_acc(%arg0: i32, %arg1: i32, %arg2: memref<8x32xbf16, #tpu.memory_space<vmem>>, %arg3: memref<32x64xbf16, #tpu.memory_space<vmem>>, %arg4: memref<1x64xf32, #tpu.memory_space<vmem>>, %arg5: memref<64x32xbf16, #tpu.memory_space<vmem>>, %arg6: memref<1x32xf32, #tpu.memory_space<vmem>>, %arg7: memref<8x32xf32, #tpu.memory_space<vmem>>) attributes {dimension_semantics = [#tpu.dimension_semantics<parallel>, #tpu.dimension_semantics<arbitrary>], iteration_bounds = array<i64: 2, 1>, scalar_prefetch = 0 : i64, scratch_operands = 0 : i64, tpu.core_type = #tpu.core_type<tc>, window_params = [{transform_indices = @transform_0, window_bounds = array<i64: 8, 32>}, {transform_indices = @transform_1, window_bounds = array<i64: 32, 64>}, {transform_indices = @transform_2, window_bounds = array<i64: 1, 64>}, {transform_indices = @transform_3, window_bounds = array<i64: 64, 32>}, {pipeline_mode = #tpu.pipeline_mode<synchronous>, transform_indices = @transform_4, window_bounds = array<i64: 1, 32>}, {transform_indices = @transform_5, window_bounds = array<i64: 8, 32>}]} {
    %c0_i32 = arith.constant 0 : i32
    %0 = arith.cmpi eq, %arg1, %c0_i32 : i32
    %1 = arith.extui %0 : i1 to i32
    %c0_i32_0 = arith.constant 0 : i32
    %2 = arith.cmpi ne, %1, %c0_i32_0 : i32
    scf.if %2 {
      %cst_16 = arith.constant 0.000000e+00 : f32
      %20 = vector.broadcast %cst_16 : f32 to vector<8x32xf32>
      %c0_17 = arith.constant 0 : index
      %c0_18 = arith.constant 0 : index
      %21 = vector.load %arg7[%c0_17, %c0_18] : memref<8x32xf32, #tpu.memory_space<vmem>>, vector<8x32xf32>
      tpu.vector_store %arg7[%c0_17, %c0_18], %20 {strides = array<i32>} : memref<8x32xf32, #tpu.memory_space<vmem>>, vector<8x32xf32>,
    } else {
    }
    %c0 = arith.constant 0 : index
    %c0_1 = arith.constant 0 : index
    %3 = vector.load %arg2[%c0, %c0_1] : memref<8x32xbf16, #tpu.memory_space<vmem>>, vector<8x32xbf16>
    %c0_2 = arith.constant 0 : index
    %c0_3 = arith.constant 0 : index
    %4 = vector.load %arg3[%c0_2, %c0_3] : memref<32x64xbf16, #tpu.memory_space<vmem>>, vector<32x64xbf16>
    %cst = arith.constant dense<0.000000e+00> : vector<8x64xf32>
    %5 = tpu.matmul %3, %4, %cst {dimension_numbers = #tpu.dot_dimension_numbers<[1], [0], [0], [1], [0, 0, 1, 1], [], []>} : vector<8x32xbf16>, vector<32x64xbf16>, vector<8x64xf32> -> vector<8x64xf32>
    %c0_4 = arith.constant 0 : index
    %c0_5 = arith.constant 0 : index
    %6 = vector.load %arg4[%c0_4, %c0_5] : memref<1x64xf32, #tpu.memory_space<vmem>>, vector<1x64xf32>
    %7 = vector.broadcast %6 : vector<1x64xf32> to vector<8x64xf32>
    %8 = arith.addf %5, %7 : vector<8x64xf32>
    %cst_6 = arith.constant 0.000000e+00 : f32
    %9 = vector.broadcast %cst_6 : f32 to vector<8x64xf32>
    %10 = arith.maximumf %8, %9 : vector<8x64xf32>
    %c0_7 = arith.constant 0 : index
    %c0_8 = arith.constant 0 : index
    %11 = vector.load %arg7[%c0_7, %c0_8] : memref<8x32xf32, #tpu.memory_space<vmem>>, vector<8x32xf32>
    %12 = arith.truncf %10 : vector<8x64xf32> to vector<8x64xbf16>
    %c0_9 = arith.constant 0 : index
    %c0_10 = arith.constant 0 : index
    %13 = vector.load %arg5[%c0_9, %c0_10] : memref<64x32xbf16, #tpu.memory_space<vmem>>, vector<64x32xbf16>
    %cst_11 = arith.constant dense<0.000000e+00> : vector<8x32xf32>
    %14 = tpu.matmul %12, %13, %cst_11 {dimension_numbers = #tpu.dot_dimension_numbers<[1], [0], [0], [1], [0, 0, 1, 1], [], []>} : vector<8x64xbf16>, vector<64x32xbf16>, vector<8x32xf32> -> vector<8x32xf32>
    %15 = arith.addf %11, %14 : vector<8x32xf32>
    %c0_12 = arith.constant 0 : index
    %c0_13 = arith.constant 0 : index
    %16 = vector.load %arg7[%c0_12, %c0_13] : memref<8x32xf32, #tpu.memory_space<vmem>>, vector<8x32xf32>
    tpu.vector_store %arg7[%c0_12, %c0_13], %15 {strides = array<i32>} : memref<8x32xf32, #tpu.memory_space<vmem>>, vector<8x32xf32>,
    %c0_i32_14 = arith.constant 0 : i32
    %17 = arith.cmpi eq, %arg1, %c0_i32_14 : i32
    %18 = arith.extui %17 : i1 to i32
    %c0_i32_15 = arith.constant 0 : i32
    %19 = arith.cmpi ne, %18, %c0_i32_15 : i32
    scf.if %19 {
      %c0_16 = arith.constant 0 : index
      %c0_17 = arith.constant 0 : index
      %20 = vector.load %arg7[%c0_16, %c0_17] : memref<8x32xf32, #tpu.memory_space<vmem>>, vector<8x32xf32>
      %c0_18 = arith.constant 0 : index
      %c0_19 = arith.constant 0 : index
      %21 = vector.load %arg6[%c0_18, %c0_19] : memref<1x32xf32, #tpu.memory_space<vmem>>, vector<1x32xf32>
      %22 = vector.broadcast %21 : vector<1x32xf32> to vector<8x32xf32>
      %23 = arith.addf %20, %22 : vector<8x32xf32>
      %c0_20 = arith.constant 0 : index
      %c0_21 = arith.constant 0 : index
      %24 = vector.load %arg7[%c0_20, %c0_21] : memref<8x32xf32, #tpu.memory_space<vmem>>, vector<8x32xf32>
      tpu.vector_store %arg7[%c0_20, %c0_21], %23 {strides = array<i32>} : memref<8x32xf32, #tpu.memory_space<vmem>>, vector<8x32xf32>,
    } else {
    }
    return
  }
  func.func @transform_0(%arg0: i32, %arg1: i32) -> (i32, i32) {
    %c0_i32 = arith.constant 0 : i32
    %c0_i32_0 = arith.constant 0 : i32
    return %arg0, %c0_i32 : i32, i32
  }
  func.func @transform_1(%arg0: i32, %arg1: i32) -> (i32, i32) {
    %c0_i32 = arith.constant 0 : i32
    %c0_i32_0 = arith.constant 0 : i32
    return %c0_i32, %arg1 : i32, i32
  }
  func.func @transform_2(%arg0: i32, %arg1: i32) -> (i32, i32) {
    %c0_i32 = arith.constant 0 : i32
    %c0_i32_0 = arith.constant 0 : i32
    return %c0_i32, %arg1 : i32, i32
  }
  func.func @transform_3(%arg0: i32, %arg1: i32) -> (i32, i32) {
    %c0_i32 = arith.constant 0 : i32
    %c0_i32_0 = arith.constant 0 : i32
    return %arg1, %c0_i32 : i32, i32
  }
  func.func @transform_4(%arg0: i32, %arg1: i32) -> (i32, i32) {
    %c0_i32 = arith.constant 0 : i32
    %c0_i32_0 = arith.constant 0 : i32
    %c0_i32_1 = arith.constant 0 : i32
    return %c0_i32, %c0_i32_0 : i32, i32
  }
  func.func @transform_5(%arg0: i32, %arg1: i32) -> (i32, i32) {
    %c0_i32 = arith.constant 0 : i32
    %c0_i32_0 = arith.constant 0 : i32
    return %arg0, %c0_i32 : i32, i32
  }
}

</mosaic_0001>

<llo_original>
// kernel: tpu_custom_call.1
$region0: #{tpu_custom_call.1}
  #allocation0 [shape = 'u32[]', space=smem, size = 0x4, offset = 0x4, fixed_abs, tag = 'smem constant byte address 0x4 - core index']
  #allocation1 [shape = 'u32[72,128]{1,0:T(1,128)}', space=vmem, size = 0x9000, scoped, tag = 'internal scratch']
  %s0 = inlined_call_operand.vmem [shape: bf16[16,32], index: 0, kind: input, shape index: {}]
  %s1 = inlined_call_operand.vmem [shape: bf16[32,64], index: 1, kind: input, shape index: {}]
  %s2 = inlined_call_operand.vmem [shape: f32[1,64], index: 2, kind: input, shape index: {}]
  %s3 = inlined_call_operand.vmem [shape: bf16[64,32], index: 3, kind: input, shape index: {}]
  %s4 = inlined_call_operand.vmem [shape: f32[1,32], index: 4, kind: input, shape index: {}]
  %s5 = inlined_call_operand.hbm [shape: f32[16,32], index: 5, kind: output, shape index: {}]
  %s6 = sld [smem:[#allocation0]]
  $region61: #{tpu_custom_call.1} parent=0
    _
  %s8 = ssub.s32 1, %s6
  %s9 = scalar_select 0, %s8, %s6
  $region1: #{tpu_custom_call.1} parent=0
    #allocation2 [shape = 'u8[8192]{0}', space=vmem, size = 0x2000, scoped, tag = 'output window, operand 0']
    #allocation3 [shape = 's32[2]{0}', space=sflag, size = 0x8, scoped, tag = 'scoped memory for tpu_custom_call.1']
    %10 = vsyncpa [#allocation3], 0
    %s11 = scalar_lea.sflag [#allocation3], 1
    %12 = vsyncpa %s11, 0
    loop: start=0, step=1, limit=4
    $region2: #{tpu_custom_call.1} parent=1 // loop_pre_header
      _
    $region3: #{tpu_custom_call.1} parent=1 // loop_header
      %s14 = sphi 0, %s18
      %p15 = scmp.ge.s32.totalorder %s14, 4
      %s21 = sphi 0, %s33
      %s22 = sphi 0, %s29
      %s23 = sphi 0, %s21
      %s24 = sphi 0, %s22
      %s25 = sphi 0, %s23
      %s26 = sphi 0, %s24
      %s36 = sphi 0, %s38
      %s39 = sphi 0, %s36
      %s40 = sphi 0, %s39
      %s56 = sphi 0, %s40
      %s62 = sphi 0, %s64
      %s65 = sphi 0, %s62
      %s66 = sphi 0, %s65
      %s82 = sphi 0, %s66
      %s88 = sphi 0, %s90
      %s91 = sphi 0, %s88
      %s92 = sphi 0, %s91
      %s108 = sphi 0, %s92
      %s114 = sphi 0, %s116
      %s117 = sphi 0, %s114
      %s118 = sphi 0, %s117
      %s134 = sphi 0, %s118
      %s138 = sphi 0, %s138
      %s140 = sphi 0, %s138
      %s141 = sphi 0, %s140
      %s155 = sphi 0, %s141
      %s161 = sphi 0, %s163
      %s164 = sphi 0, %s161
      %s165 = sphi 0, %s164
      %s181 = sphi 0, %s165
    $region4: #{tpu_custom_call.1} parent=1 // loop_header_branch
      %17 = sbr.rel (%p15) target = $region8
    $region5: #{tpu_custom_call.1} parent=1 // loop_body
      %s19 = ssub.s32 %s14, 1
      %s20 = ssub.s32 %s14, 2
      %s27 = sadd.s32 1, %s22
      %p28 = scmp.ge.s32.totalorder %s27, 1
      %s29 = scalar_select %p28, 0, %s27
      %s30 = sadd.s32 1, %s21
      %s31 = scalar_select %p28, %s30, %s21
      %p32 = scmp.ge.s32.totalorder %s31, 2
      %s33 = scalar_select %p32, 0, %s31
      %s34 = ssub.s32 %s21, %s33
      %p35 = scmp.eq.s32.totalorder %s34, 0
      %s37 = sadd.s32 %s36, 1
      %s38 = scalar_select %p35, %s36, %s37
      %p41 = pneg %p35
      %p42 = scmp.eq.s32.totalorder %s14, 1
      %p43 = por %p41, %p42
      %p44 = scmp.ne.s32.totalorder %s36, %s39
      %p45 = scmp.eq.s32.totalorder %s14, 0
      %p46 = por %p44, %p45
      %p47 = scmp.ne.s32.totalorder %s36, %s39
      %p48 = scmp.eq.s32.totalorder %s19, 1
      %p49 = por %p47, %p48
      %p50 = scmp.ne.s32.totalorder %s39, %s40
      %p51 = scmp.eq.s32.totalorder %s19, 0
      %p52 = por %p50, %p51
      %p53 = scmp.ne.s32.totalorder %s39, %s40
      %p54 = scmp.eq.s32.totalorder %s20, 1
      %p55 = por %p53, %p54
      %p57 = scmp.ne.s32.totalorder %s40, %s56
      %p58 = scmp.eq.s32.totalorder %s20, 0
      %p59 = por %p57, %p58
      %s60 = ssub.s32 %s22, %s29
      %p61 = scmp.eq.s32.totalorder %s60, 0
      %s63 = sadd.s32 %s62, 1
      %s64 = scalar_select %p61, %s62, %s63
      %p67 = pneg %p61
      %p68 = scmp.eq.s32.totalorder %s14, 1
      %p69 = por %p67, %p68
      %p70 = scmp.ne.s32.totalorder %s62, %s65
      %p71 = scmp.eq.s32.totalorder %s14, 0
      %p72 = por %p70, %p71
      %p73 = scmp.ne.s32.totalorder %s62, %s65
      %p74 = scmp.eq.s32.totalorder %s19, 1
      %p75 = por %p73, %p74
      %p76 = scmp.ne.s32.totalorder %s65, %s66
      %p77 = scmp.eq.s32.totalorder %s19, 0
      %p78 = por %p76, %p77
      %p79 = scmp.ne.s32.totalorder %s65, %s66
      %p80 = scmp.eq.s32.totalorder %s20, 1
      %p81 = por %p79, %p80
      %p83 = scmp.ne.s32.totalorder %s66, %s82
      %p84 = scmp.eq.s32.totalorder %s20, 0
      %p85 = por %p83, %p84
      %s86 = ssub.s32 %s22, %s29
      %p87 = scmp.eq.s32.totalorder %s86, 0
      %s89 = sadd.s32 %s88, 1
      %s90 = scalar_select %p87, %s88, %s89
      %p93 = pneg %p87
      %p94 = scmp.eq.s32.totalorder %s14, 1
      %p95 = por %p93, %p94
      %p96 = scmp.ne.s32.totalorder %s88, %s91
      %p97 = scmp.eq.s32.totalorder %s14, 0
      %p98 = por %p96, %p97
      %p99 = scmp.ne.s32.totalorder %s88, %s91
      %p100 = scmp.eq.s32.totalorder %s19, 1
      %p101 = por %p99, %p100
      %p102 = scmp.ne.s32.totalorder %s91, %s92
      %p103 = scmp.eq.s32.totalorder %s19, 0
      %p104 = por %p102, %p103
      %p105 = scmp.ne.s32.totalorder %s91, %s92
      %p106 = scmp.eq.s32.totalorder %s20, 1
      %p107 = por %p105, %p106
      %p109 = scmp.ne.s32.totalorder %s92, %s108
      %p110 = scmp.eq.s32.totalorder %s20, 0
      %p111 = por %p109, %p110
      %s112 = ssub.s32 %s22, %s29
      %p113 = scmp.eq.s32.totalorder %s112, 0
      %s115 = sadd.s32 %s114, 1
      %s116 = scalar_select %p113, %s114, %s115
      %p119 = pneg %p113
      %p120 = scmp.eq.s32.totalorder %s14, 1
      %p121 = por %p119, %p120
      %p122 = scmp.ne.s32.totalorder %s114, %s117
      %p123 = scmp.eq.s32.totalorder %s14, 0
      %p124 = por %p122, %p123
      %p125 = scmp.ne.s32.totalorder %s114, %s117
      %p126 = scmp.eq.s32.totalorder %s19, 1
      %p127 = por %p125, %p126
      %p128 = scmp.ne.s32.totalorder %s117, %s118
      %p129 = scmp.eq.s32.totalorder %s19, 0
      %p130 = por %p128, %p129
      %p131 = scmp.ne.s32.totalorder %s117, %s118
      %p132 = scmp.eq.s32.totalorder %s20, 1
      %p133 = por %p131, %p132
      %p135 = scmp.ne.s32.totalorder %s118, %s134
      %p136 = scmp.eq.s32.totalorder %s20, 0
      %p137 = por %p135, %p136
      %s139 = sadd.s32 %s138, 1
      %p142 = scmp.eq.s32.totalorder %s14, 1
      %p143 = scmp.ne.s32.totalorder %s138, %s140
      %p144 = scmp.eq.s32.totalorder %s14, 0
      %p145 = por %p143, %p144
      %p146 = scmp.ne.s32.totalorder %s138, %s140
      %p147 = scmp.eq.s32.totalorder %s19, 1
      %p148 = por %p146, %p147
      %p149 = scmp.ne.s32.totalorder %s140, %s141
      %p150 = scmp.eq.s32.totalorder %s19, 0
      %p151 = por %p149, %p150
      %p152 = scmp.ne.s32.totalorder %s140, %s141
      %p153 = scmp.eq.s32.totalorder %s20, 1
      %p154 = por %p152, %p153
      %p156 = scmp.ne.s32.totalorder %s141, %s155
      %p157 = scmp.eq.s32.totalorder %s20, 0
      %p158 = por %p156, %p157
      %s159 = ssub.s32 %s21, %s33
      %p160 = scmp.eq.s32.totalorder %s159, 0
      %s162 = sadd.s32 %s161, 1
      %s163 = scalar_select %p160, %s161, %s162
      %p166 = pneg %p160
      %p167 = scmp.eq.s32.totalorder %s14, 1
      %p168 = por %p166, %p167
      %p169 = scmp.ne.s32.totalorder %s161, %s164
      %p170 = scmp.eq.s32.totalorder %s14, 0
      %p171 = por %p169, %p170
      %p172 = scmp.ne.s32.totalorder %s161, %s164
      %p173 = scmp.eq.s32.totalorder %s19, 1
      %p174 = por %p172, %p173
      %p175 = scmp.ne.s32.totalorder %s164, %s165
      %p176 = scmp.eq.s32.totalorder %s19, 0
      %p177 = por %p175, %p176
      %p178 = scmp.ne.s32.totalorder %s164, %s165
      %p179 = scmp.eq.s32.totalorder %s20, 1
      %p180 = por %p178, %p179
      %p182 = scmp.ne.s32.totalorder %s165, %s181
      %p183 = scmp.eq.s32.totalorder %s20, 0
      %p184 = por %p182, %p183
      %p185 = scmp.le.s32.totalorder 1, %s14
      %p186 = scmp.lt.s32.totalorder %s14, 3
      %p187 = pnand %p185, %p186
      %p188 = pneg %p187
      // Predicated region
      $region9: #{tpu_custom_call.1} parent=5 // pred_check
        _
      $region10: #{tpu_custom_call.1} parent=5 // pred_check_branch
        %190 = sbr.rel (%p187) target = $region12
      $region11: #{tpu_custom_call.1} parent=5 // pred_region
        %s191 = ssub.s32 %s14, 1
        // Predicated region
        $region13: #{tpu_custom_call.1} parent=11 // pred_check
          %p192 = pneg %p78
        $region14: #{tpu_custom_call.1} parent=11 // pred_check_branch
          %194 = sbr.rel (%p192) target = $region16
        $region15: #{tpu_custom_call.1} parent=11 // pred_region
          %p195 = scmp.lt.s32.totalorder %s24, 0
          %s196 = scalar_select %p195, %s24, 0
          %s197 = smul.addr %s196, 4
          %s198 = scalar_lea.vmem %s1, %s197
        $region16: #{tpu_custom_call.1} parent=11 // pred_fallthru
          _
        // Predicated region
        $region17: #{tpu_custom_call.1} parent=11 // pred_check
          %p199 = pneg %p104
        $region18: #{tpu_custom_call.1} parent=11 // pred_check_branch
          %201 = sbr.rel (%p199) target = $region20
        $region19: #{tpu_custom_call.1} parent=11 // pred_region
          %p202 = scmp.lt.s32.totalorder %s24, 0
          %s203 = scalar_select %p202, %s24, 0
          %s204 = scalar_lea.vmem %s2, %s203
        $region20: #{tpu_custom_call.1} parent=11 // pred_fallthru
          _
        // Predicated region
        $region21: #{tpu_custom_call.1} parent=11 // pred_check
          %p205 = pneg %p130
        $region22: #{tpu_custom_call.1} parent=11 // pred_check_branch
          %207 = sbr.rel (%p205) target = $region24
        $region23: #{tpu_custom_call.1} parent=11 // pred_region
          %s208 = smul.u32 8, %s24
          %p209 = scmp.lt.s32.totalorder %s208, 7
          %s210 = scalar_select %p209, %s208, 7
          %s211 = smul.addr %s210, 4
          %s212 = scalar_lea.vmem %s3, %s211
          %s213 = smul.u32 8, %s24
        $region24: #{tpu_custom_call.1} parent=11 // pred_fallthru
          _
        // Predicated region
        $region25: #{tpu_custom_call.1} parent=11 // pred_check
          %p214 = pneg %p151
        $region26: #{tpu_custom_call.1} parent=11 // pred_check_branch
          %216 = sbr.rel (%p214) target = $region28
        $region27: #{tpu_custom_call.1} parent=11 // pred_region
          _
        $region28: #{tpu_custom_call.1} parent=11 // pred_fallthru
          _
      $region12: #{tpu_custom_call.1} parent=5 // pred_fallthru
        _
      %p217 = scmp.lt.s32.totalorder %s14, 2
      // Predicated region
      $region29: #{tpu_custom_call.1} parent=5 // pred_check
        %p218 = pneg %p217
      $region30: #{tpu_custom_call.1} parent=5 // pred_check_branch
        %220 = sbr.rel (%p218) target = $region32
      $region31: #{tpu_custom_call.1} parent=5 // pred_region
        // Predicated region
        $region33: #{tpu_custom_call.1} parent=31 // pred_check
          %p221 = pneg %p46
        $region34: #{tpu_custom_call.1} parent=31 // pred_check_branch
          %223 = sbr.rel (%p221) target = $region36
        $region35: #{tpu_custom_call.1} parent=31 // pred_region
          %p224 = scmp.lt.s32.totalorder %s21, 1
          %s225 = scalar_select %p224, %s21, 1
          %s226 = smul.addr %s225, 4
          %s227 = scalar_lea.vmem %s0, %s226
        $region36: #{tpu_custom_call.1} parent=31 // pred_fallthru
          _
      $region32: #{tpu_custom_call.1} parent=5 // pred_fallthru
        _
      %p228 = scmp.le.s32.totalorder 1, %s14
      %p229 = scmp.lt.s32.totalorder %s14, 3
      %p230 = pnand %p228, %p229
      %p231 = pneg %p230
      // Predicated region
      $region37: #{tpu_custom_call.1} parent=5 // pred_check
        _
      $region38: #{tpu_custom_call.1} parent=5 // pred_check_branch
        %233 = sbr.rel (%p230) target = $region40
      $region39: #{tpu_custom_call.1} parent=5 // pred_region
        %s234 = ssub.s32 %s14, 1
        %p235 = scmp.lt.s32.totalorder %s23, 1
        %s236 = scalar_select %p235, %s23, 1
        %s237 = smul.addr %s236, 4
        %s238 = scalar_lea.vmem %s0, %s237
        %p239 = pneg %p52
        %p240 = pneg %p49
        %p241 = scmp.lt.s32.totalorder %s24, 0
        %s242 = scalar_select %p241, %s24, 0
        %s243 = smul.addr %s242, 4
        %s244 = scalar_lea.vmem %s1, %s243
        %p245 = pneg %p78
        %p246 = pneg %p75
        %p247 = scmp.lt.s32.totalorder %s24, 0
        %s248 = scalar_select %p247, %s24, 0
        %s249 = scalar_lea.vmem %s2, %s248
        %p250 = pneg %p104
        %p251 = pneg %p101
        %s252 = smul.u32 8, %s24
        %p253 = scmp.lt.s32.totalorder %s252, 7
        %s254 = scalar_select %p253, %s252, 7
        %s255 = smul.addr %s254, 4
        %s256 = scalar_lea.vmem %s3, %s255
        %p257 = pneg %p130
        %p258 = pneg %p127
        %p259 = pneg %p151
        %p260 = pneg %p148
        %p261 = pneg %p177
        %p262 = pneg %p174
        %s263 = sand.u32 %s164, 1
        %s264 = scalar_lea.sflag [#allocation3], %s263
        %s265 = sand.u32 %s164, 1
        %s266 = smul.addr %s265, 8
        %s267 = scalar_lea.vmem [#allocation2], %s266
        %p268 = scmp.lt.s32.totalorder %s23, 1
        %s269 = scalar_select %p268, %s23, 1
        %s270 = smul.addr %s269, 4
        %s271 = scalar_lea.vmem %s0, %s270
        %p272 = scmp.lt.s32.totalorder %s24, 0
        %s273 = scalar_select %p272, %s24, 0
        %s274 = smul.addr %s273, 4
        %s275 = scalar_lea.vmem %s1, %s274
        %p276 = scmp.lt.s32.totalorder %s24, 0
        %s277 = scalar_select %p276, %s24, 0
        %s278 = scalar_lea.vmem %s2, %s277
        %s279 = smul.u32 8, %s24
        %p280 = scmp.lt.s32.totalorder %s279, 7
        %s281 = scalar_select %p280, %s279, 7
        %s282 = smul.addr %s281, 4
        %s283 = scalar_lea.vmem %s3, %s282
        %s284 = smul.u32 8, %s24
        %p286 = scmp.eq.s32.totalorder %s24, 0
        // Predicated region
        $region41: #{tpu_custom_call.1} parent=39 // pred_check
          %p287 = pneg %p286
        $region42: #{tpu_custom_call.1} parent=39 // pred_check_branch
          %289 = sbr.rel (%p287) target = $region44
        $region43: #{tpu_custom_call.1} parent=39 // pred_region
          %vm290 = vcmask 261120
          %291 = vst.msk [vmem:[%s267] sm:$0xff] %vm290, 0.0
        $region44: #{tpu_custom_call.1} parent=39 // pred_fallthru
          _
        %v292 = vld [vmem:[%s271] sm:$0xf]
        %v293 = vld [vmem:[%s275] sm:$0xf]
        %v294 = vld [vmem:[%s275 + $0x4] sm:$0xf]
        %v295 = vld [vmem:[%s275 + $0x8] sm:$0xf]
        %v296 = vld [vmem:[%s275 + $0xc] sm:$0xf]
        %v297 = vld [vmem:[%s278] sm:$0x1]
        %v299 = vperm.slane %v297, 0
        %v305 = vunpack.c.l.b16 %v293
        %v306 = vunpack.c.l.b16 %v294
        %v307 = vunpack.c.l.b16 %v295
        %v308 = vunpack.c.l.b16 %v296
        %v309 = vpack.c.b16 %v306, %v305
        %v310 = vpack.c.b16 %v308, %v307
        %vm313 = vcmask 261120
        %v315 = vsel %vm313, %v292, 0
        %317 = vmatpush.bf16.msra.mxu0 0
        %318 = vmatpush.bf16.msra.mxu0 0
        %319 = vmatpush.bf16.msra.mxu0 0
        %320 = vmatpush.bf16.msra.mxu0 0
        %321 = vmatpush.bf16.msra.mxu0 0
        %322 = vmatpush.bf16.msra.mxu0 0
        %323 = vmatpush.bf16.msra.mxu0 %v310
        %324 = vmatpush.bf16.msra.mxu0 %v309
        %325 = vmatmul.bf16.gmra.mxu0 %v315
        %v326 = vpop.f32.mrf.mxu0
        %v327 = vadd.f32 %v299, %v326
        %v328 = vpop.f32.mrf.mxu0
        %329 = vdwg.mxu0
        %v330 = vmax.f32 %v327, 0.0
        %v331 = vld [vmem:[%s267] sm:$0xff]
        %v332 = vpack.c.bf16 %v330, %v330
        %v333 = vld [vmem:[%s283] sm:$0xf]
        %v334 = vld [vmem:[%s283 + $0x4] sm:$0xf]
        %v335 = vld [vmem:[%s283 + $0x8] sm:$0xf]
        %v336 = vld [vmem:[%s283 + $0xc] sm:$0xf]
        %v337 = vld [vmem:[%s283 + $0x10] sm:$0xf]
        %v338 = vld [vmem:[%s283 + $0x14] sm:$0xf]
        %v339 = vld [vmem:[%s283 + $0x18] sm:$0xf]
        %v340 = vld [vmem:[%s283 + $0x1c] sm:$0xf]
        %v349 = vunpack.c.l.b16 %v333
        %v350 = vunpack.c.l.b16 %v334
        %v351 = vunpack.c.l.b16 %v335
        %v352 = vunpack.c.l.b16 %v336
        %v353 = vunpack.c.l.b16 %v337
        %v354 = vunpack.c.l.b16 %v338
        %v355 = vunpack.c.l.b16 %v339
        %v356 = vunpack.c.l.b16 %v340
        %v357 = vpack.c.b16 %v350, %v349
        %v358 = vpack.c.b16 %v352, %v351
        %v359 = vpack.c.b16 %v354, %v353
        %v360 = vpack.c.b16 %v356, %v355
        %vm365 = vcmask 523264
        %v367 = vsel %vm365, %v332, 0
        %369 = vmatpush.bf16.msra.mxu0 0
        %370 = vmatpush.bf16.msra.mxu0 0
        %371 = vmatpush.bf16.msra.mxu0 0
        %372 = vmatpush.bf16.msra.mxu0 0
        %373 = vmatpush.bf16.msra.mxu0 %v360
        %374 = vmatpush.bf16.msra.mxu0 %v359
        %375 = vmatpush.bf16.msra.mxu0 %v358
        %376 = vmatpush.bf16.msra.mxu0 %v357
        %377 = vmatmul.bf16.gmra.mxu0 %v367
        %v378 = vpop.f32.mrf.mxu0
        %v379 = vadd.f32 0.0, %v378
        %v380 = vpop.f32.mrf.mxu0
        %381 = vdwg.mxu0
        %v382 = vadd.f32 %v331, %v379
        %383 = vst.msk [vmem:[%s267] sm:$0xff] %vm313, %v382
        // Predicated region
        $region45: #{tpu_custom_call.1} parent=39 // pred_check
          %p384 = pneg %p286
        $region46: #{tpu_custom_call.1} parent=39 // pred_check_branch
          %386 = sbr.rel (%p384) target = $region48
        $region47: #{tpu_custom_call.1} parent=39 // pred_region
          %v387 = vld [vmem:[%s267] sm:$0xff]
          %v388 = vld [vmem:[%s4] sm:$0x1]
          %v390 = vperm.slane %v388, 0
          %v392 = vadd.f32 %v387, %v390
          %393 = vst.msk [vmem:[%s267] sm:$0xff] %vm313, %v392
        $region48: #{tpu_custom_call.1} parent=39 // pred_fallthru
          _
        %s394 = sand.u32 %s164, 1
        %s395 = scalar_lea.sflag [#allocation3], %s394
        %s396 = sand.u32 %s164, 1
        %s397 = smul.addr %s396, 8
        %s398 = scalar_lea.vmem [#allocation2], %s397
        // Predicated region
        $region49: #{tpu_custom_call.1} parent=39 // pred_check
          %p399 = pneg %p174
        $region50: #{tpu_custom_call.1} parent=39 // pred_check_branch
          %401 = sbr.rel (%p399) target = $region52
        $region51: #{tpu_custom_call.1} parent=39 // pred_region
          %403 = vsyncadd %s395, 0
          %s404 = smul.addr %s23, 8
          %s405 = scalar_lea.hbm %s5, %s404
          %s407 = sshll.u32 %s398, 4
          %s408 = int_to_ptr.vmem [resolvable:$true] %s407
          %s409 = sshll.u32 %s405, 4
          %s410 = int_to_ptr.hbm [resolvable:$true] %s409
          %412 = dma.vmem_to_hbm [thread:$0]  %s408, 128, %s410, %s395
        $region52: #{tpu_custom_call.1} parent=39 // pred_fallthru
          _
      $region40: #{tpu_custom_call.1} parent=5 // pred_fallthru
        _
      %p413 = scmp.le.s32.totalorder 2, %s14
      // Predicated region
      $region53: #{tpu_custom_call.1} parent=5 // pred_check
        %p414 = pneg %p413
      $region54: #{tpu_custom_call.1} parent=5 // pred_check_branch
        %416 = sbr.rel (%p414) target = $region56
      $region55: #{tpu_custom_call.1} parent=5 // pred_region
        %s417 = ssub.s32 %s14, 2
        // Predicated region
        $region57: #{tpu_custom_call.1} parent=55 // pred_check
          %p418 = pneg %p180
        $region58: #{tpu_custom_call.1} parent=55 // pred_check_branch
          %420 = sbr.rel (%p418) target = $region60
        $region59: #{tpu_custom_call.1} parent=55 // pred_region
          %s421 = sand.u32 %s165, 1
          %s422 = scalar_lea.sflag [#allocation3], %s421
          %s423 = sand.u32 %s165, 1
          %s424 = smul.addr %s423, 8
          %s425 = scalar_lea.vmem [#allocation2], %s424
          %427 = dma.done %s422, 128
        $region60: #{tpu_custom_call.1} parent=55 // pred_fallthru
          _
      $region56: #{tpu_custom_call.1} parent=5 // pred_fallthru
        _
    $region6: #{tpu_custom_call.1} parent=1 // loop_footer
      %s18 = sadd.s32 1, %s14
    $region7: #{tpu_custom_call.1} parent=1 // loop_footer_branch
      %13 = sbr.rel target = $region3
    $region8: #{tpu_custom_call.1} parent=1 // loop_exit
      _
    %428 = vsyncpa [#allocation3], 1
    %s429 = scalar_lea.sflag [#allocation3], 1
    %430 = vsyncpa %s429, 1

</llo_original>
